<compile_context>
chip_gen: v7x
topology: tpu7x:2x2x1
jax: 0.10.0
libtpu: 0.0.40
codegen_flags: <defaults>
</compile_context>

<pallas_src>
import functools

import numpy as np
import jax
import jax.numpy as jnp
from jax import lax
from jax.experimental import pallas as pl
from jax.experimental.pallas import tpu as pltpu


def _pooling_kernel(x_ref, m_ref, g_ref, o_ref, *, width, radius):
    """One (n, channel-block) step.

    x_ref:  (1, Cblk, P)  image block, P = H*W flattened onto lanes
    m_ref:  (1, 1, P)     mask plane (broadcast over channels)
    g_ref:  (4r+1, P)     row 0: 1/valid_count; rows 1+4(d-1)..: [left, right,
                          up, down] 0/1 edge-validity masks for distance d
    o_ref:  (1, Cblk, P)  output block
    """
    xm = x_ref[0] * m_ref[0]                      # (Cblk, P), lane-dense
    inv_cnt = g_ref[0:1, :]                       # (1, P)

    # --- sum along W (flat stride 1) ---------------------------------------
    s = xm
    for d in range(1, radius + 1):
        base = 1 + 4 * (d - 1)
        lmask = g_ref[base + 0:base + 1, :]       # j >= d      (left  nbr valid)
        rmask = g_ref[base + 1:base + 2, :]       # j <  W - d  (right nbr valid)
        s = s + jnp.roll(xm, d, axis=1) * lmask
        s = s + jnp.roll(xm, -d, axis=1) * rmask

    # --- sum along H (flat stride W) ---------------------------------------
    t = s
    for d in range(1, radius + 1):
        base = 1 + 4 * (d - 1)
        umask = g_ref[base + 2:base + 3, :]       # i >= d      (up   nbr valid)
        dmask = g_ref[base + 3:base + 4, :]       # i < H - d   (down nbr valid)
        t = t + jnp.roll(s, d * width, axis=1) * umask
        t = t + jnp.roll(s, -d * width, axis=1) * dmask

    # avg-pool(count_include_pad=False) minus the masked input
    o_ref[0] = (t * inv_cnt - xm).astype(o_ref.dtype)


def _pick_cblk(C, P, itemsize, budget_bytes):
    """Largest legal channel-block: == C, or a divisor of C that is a
    multiple of 8 (BlockSpec sublane rule) and fits the per-block budget."""
    if C * P * itemsize <= budget_bytes:
        return C
    best = 0
    for cand in range(8, C, 8):
        if C % cand == 0 and cand * P * itemsize <= budget_bytes:
            best = cand
    return best if best > 0 else C


def pooling_block(x, mask, pool_size=3, block_budget_bytes=2 << 20):
    """x: (N, C, H, W) f32; mask: (N, 1, H, W) f32 (broadcast over channels)."""
    assert pool_size % 2 == 1, "only odd pool sizes keep spatial shape"
    N, C, H, W = x.shape
    assert mask.shape == (N, 1, H, W)
    r = pool_size // 2
    P = H * W

    # ---- grid-invariant geometry: reciprocal counts + edge masks (host) ----
    ih, iw = np.arange(H), np.arange(W)
    row_cnt = np.minimum(ih + r, H - 1) - np.maximum(ih - r, 0) + 1
    col_cnt = np.minimum(iw + r, W - 1) - np.maximum(iw - r, 0) + 1
    cnt = (row_cnt[:, None] * col_cnt[None, :]).astype(np.float32)     # (H, W)
    jj = np.tile(iw, H)                  # column index per flat position
    kk = np.arange(P)                    # flat index
    rows = [1.0 / cnt.reshape(-1)]
    for d in range(1, r + 1):
        rows.append((jj >= d).astype(np.float32))            # left  nbr valid
        rows.append((jj < W - d).astype(np.float32))          # right nbr valid
        rows.append((kk >= d * W).astype(np.float32))          # up    nbr valid
        rows.append((kk < P - d * W).astype(np.float32))        # down  nbr valid
    geom = jnp.asarray(np.stack(rows, axis=0))                 # (4r+1, P)

    # Free reshapes (merge contiguous trailing dims) -> lane-dense last axis.
    x3 = x.reshape(N, C, P)
    m3 = mask.reshape(N, 1, P)

    cblk = _pick_cblk(C, P, jnp.dtype(x.dtype).itemsize, block_budget_bytes)
    grid = (N, C // cblk)   # channel blocks innermost -> mask/geom DMA reused

    kern = functools.partial(_pooling_kernel, width=W, radius=r)

    out = pl.pallas_call(
        kern,
        out_shape=jax.ShapeDtypeStruct((N, C, P), x.dtype),
        grid_spec=pltpu.PrefetchScalarGridSpec(
            num_scalar_prefetch=0,
            grid=grid,
            in_specs=[
                pl.BlockSpec((1, cblk, P), lambda n, c: (n, c, 0)),      # x
                pl.BlockSpec((1, 1, P), lambda n, c: (n, 0, 0)),         # mask
                pl.BlockSpec((4 * r + 1, P), lambda n, c: (0, 0)),       # geometry
            ],
            out_specs=pl.BlockSpec((1, cblk, P), lambda n, c: (n, c, 0)),
        ),
        compiler_params=pltpu.CompilerParams(
            dimension_semantics=("parallel", "parallel")),
    )(x3, m3, geom)
    return out.reshape(N, C, H, W)


def pooling_block_ref(x, mask, pool_size=3):
    """Pure-JAX reference matching PyTorch semantics."""
    r = pool_size // 2
    xm = x * mask
    win = (1, 1, pool_size, pool_size)
    strides = (1, 1, 1, 1)
    pad = [(0, 0), (0, 0), (r, r), (r, r)]
    zero = jnp.array(0.0, xm.dtype)
    s = lax.reduce_window(xm, zero, lax.add, win, strides, pad)
    cnt = lax.reduce_window(jnp.ones_like(xm), zero, lax.add, win, strides, pad)
    return s / cnt - xm


if __name__ == "__main__":
    key = jax.random.PRNGKey(0)
    kx, km = jax.random.split(key)
    N, C, H, W = 2, 4, 16, 16
    x = jax.random.normal(kx, (N, C, H, W), dtype=jnp.float32)
    mask = (jax.random.uniform(km, (N, 1, H, W)) > 0.5).astype(jnp.float32)

    out = pooling_block(x, mask)
    jax.block_until_ready(out)

    ref = pooling_block_ref(x, mask)
    np.testing.assert_allclose(np.asarray(out), np.asarray(ref),
                               rtol=1e-5, atol=1e-5)
    print("KERNEL_OK")
</pallas_src>

<mosaic_0001>
module attributes {stable_mosaic.version = 11 : i64} {
  func.func @_pooling_kernel(%arg0: i32, %arg1: i32, %arg2: memref<1x4x256xf32, #tpu.memory_space<vmem>>, %arg3: memref<1x1x256xf32, #tpu.memory_space<vmem>>, %arg4: memref<5x256xf32, #tpu.memory_space<vmem>>, %arg5: memref<1x4x256xf32, #tpu.memory_space<vmem>>) attributes {dimension_semantics = [#tpu.dimension_semantics<parallel>, #tpu.dimension_semantics<parallel>], iteration_bounds = array<i64: 2, 1>, scalar_prefetch = 0 : i64, scratch_operands = 0 : i64, tpu.core_type = #tpu.core_type<tc>, window_params = [{transform_indices = @transform_0, window_bounds = array<i64: 1, 4, 256>}, {transform_indices = @transform_1, window_bounds = array<i64: 1, 1, 256>}, {pipeline_mode = #tpu.pipeline_mode<synchronous>, transform_indices = @transform_2, window_bounds = array<i64: 5, 256>}, {transform_indices = @transform_3, window_bounds = array<i64: 1, 4, 256>}]} {
    %c0 = arith.constant 0 : index
    %c0_0 = arith.constant 0 : index
    %c0_1 = arith.constant 0 : index
    %0 = vector.load %arg2[%c0, %c0_0, %c0_1] : memref<1x4x256xf32, #tpu.memory_space<vmem>>, vector<1x4x256xf32>
    %1 = vector.shape_cast %0 : vector<1x4x256xf32> to vector<4x256xf32>
    %c0_2 = arith.constant 0 : index
    %c0_3 = arith.constant 0 : index
    %c0_4 = arith.constant 0 : index
    %2 = vector.load %arg3[%c0_2, %c0_3, %c0_4] : memref<1x1x256xf32, #tpu.memory_space<vmem>>, vector<1x1x256xf32>
    %3 = vector.shape_cast %2 : vector<1x1x256xf32> to vector<1x256xf32>
    %4 = vector.broadcast %3 : vector<1x256xf32> to vector<4x256xf32>
    %5 = arith.mulf %1, %4 : vector<4x256xf32>
    %c0_5 = arith.constant 0 : index
    %c0_6 = arith.constant 0 : index
    %6 = vector.load %arg4[%c0_5, %c0_6] : memref<5x256xf32, #tpu.memory_space<vmem>>, vector<1x256xf32>
    %c1 = arith.constant 1 : index
    %c0_7 = arith.constant 0 : index
    %7 = vector.load %arg4[%c1, %c0_7] : memref<5x256xf32, #tpu.memory_space<vmem>>, vector<1x256xf32>
    %c2 = arith.constant 2 : index
    %c0_8 = arith.constant 0 : index
    %8 = vector.load %arg4[%c2, %c0_8] : memref<5x256xf32, #tpu.memory_space<vmem>>, vector<1x256xf32>
    %9 = vector.extract_strided_slice %5 {offsets = [0, 255], sizes = [4, 1], strides = [1, 1]} : vector<4x256xf32> to vector<4x1xf32>
    %10 = vector.extract_strided_slice %5 {offsets = [0, 0], sizes = [4, 255], strides = [1, 1]} : vector<4x256xf32> to vector<4x255xf32>
    %11 = tpu.concatenate %9, %10 in 1 : vector<4x1xf32>, vector<4x255xf32> -> vector<4x256xf32>
    %12 = vector.broadcast %7 : vector<1x256xf32> to vector<4x256xf32>
    %13 = arith.mulf %11, %12 : vector<4x256xf32>
    %14 = arith.addf %5, %13 : vector<4x256xf32>
    %15 = vector.extract_strided_slice %5 {offsets = [0, 1], sizes = [4, 255], strides = [1, 1]} : vector<4x256xf32> to vector<4x255xf32>
    %16 = vector.extract_strided_slice %5 {offsets = [0, 0], sizes = [4, 1], strides = [1, 1]} : vector<4x256xf32> to vector<4x1xf32>
    %17 = tpu.concatenate %15, %16 in 1 : vector<4x255xf32>, vector<4x1xf32> -> vector<4x256xf32>
    %18 = vector.broadcast %8 : vector<1x256xf32> to vector<4x256xf32>
    %19 = arith.mulf %17, %18 : vector<4x256xf32>
    %20 = arith.addf %14, %19 : vector<4x256xf32>
    %c3 = arith.constant 3 : index
    %c0_9 = arith.constant 0 : index
    %21 = vector.load %arg4[%c3, %c0_9] : memref<5x256xf32, #tpu.memory_space<vmem>>, vector<1x256xf32>
    %c4 = arith.constant 4 : index
    %c0_10 = arith.constant 0 : index
    %22 = vector.load %arg4[%c4, %c0_10] : memref<5x256xf32, #tpu.memory_space<vmem>>, vector<1x256xf32>
    %23 = vector.extract_strided_slice %20 {offsets = [0, 240], sizes = [4, 16], strides = [1, 1]} : vector<4x256xf32> to vector<4x16xf32>
    %24 = vector.extract_strided_slice %20 {offsets = [0, 0], sizes = [4, 240], strides = [1, 1]} : vector<4x256xf32> to vector<4x240xf32>
    %25 = tpu.concatenate %23, %24 in 1 : vector<4x16xf32>, vector<4x240xf32> -> vector<4x256xf32>
    %26 = vector.broadcast %21 : vector<1x256xf32> to vector<4x256xf32>
    %27 = arith.mulf %25, %26 : vector<4x256xf32>
    %28 = arith.addf %20, %27 : vector<4x256xf32>
    %29 = vector.extract_strided_slice %20 {offsets = [0, 16], sizes = [4, 240], strides = [1, 1]} : vector<4x256xf32> to vector<4x240xf32>
    %30 = vector.extract_strided_slice %20 {offsets = [0, 0], sizes = [4, 16], strides = [1, 1]} : vector<4x256xf32> to vector<4x16xf32>
    %31 = tpu.concatenate %29, %30 in 1 : vector<4x240xf32>, vector<4x16xf32> -> vector<4x256xf32>
    %32 = vector.broadcast %22 : vector<1x256xf32> to vector<4x256xf32>
    %33 = arith.mulf %31, %32 : vector<4x256xf32>
    %34 = arith.addf %28, %33 : vector<4x256xf32>
    %35 = vector.broadcast %6 : vector<1x256xf32> to vector<4x256xf32>
    %36 = arith.mulf %34, %35 : vector<4x256xf32>
    %37 = arith.subf %36, %5 : vector<4x256xf32>
    %c0_11 = arith.constant 0 : index
    %c0_12 = arith.constant 0 : index
    %c0_13 = arith.constant 0 : index
    %38 = vector.load %arg5[%c0_11, %c0_12, %c0_13] : memref<1x4x256xf32, #tpu.memory_space<vmem>>, vector<1x4x256xf32>
    %39 = vector.shape_cast %38 : vector<1x4x256xf32> to vector<4x256xf32>
    %40 = vector.shape_cast %37 : vector<4x256xf32> to vector<1x4x256xf32>
    tpu.vector_store %arg5[%c0_11, %c0_12, %c0_13], %40 {strides = array<i32>} : memref<1x4x256xf32, #tpu.memory_space<vmem>>, vector<1x4x256xf32>,
    return
  }
  func.func @transform_0(%arg0: i32, %arg1: i32) -> (i32, i32, i32) {
    %c0_i32 = arith.constant 0 : i32
    %c0_i32_0 = arith.constant 0 : i32
    return %arg0, %arg1, %c0_i32 : i32, i32, i32
  }
  func.func @transform_1(%arg0: i32, %arg1: i32) -> (i32, i32, i32) {
    %c0_i32 = arith.constant 0 : i32
    %c0_i32_0 = arith.constant 0 : i32
    %c0_i32_1 = arith.constant 0 : i32
    return %arg0, %c0_i32, %c0_i32_0 : i32, i32, i32
  }
  func.func @transform_2(%arg0: i32, %arg1: i32) -> (i32, i32) {
    %c0_i32 = arith.constant 0 : i32
    %c0_i32_0 = arith.constant 0 : i32
    %c0_i32_1 = arith.constant 0 : i32
    return %c0_i32, %c0_i32_0 : i32, i32
  }
  func.func @transform_3(%arg0: i32, %arg1: i32) -> (i32, i32, i32) {
    %c0_i32 = arith.constant 0 : i32
    %c0_i32_0 = arith.constant 0 : i32
    return %arg0, %arg1, %c0_i32 : i32, i32, i32
  }
}

</mosaic_0001>

<llo_original>
// kernel: tpu_custom_call.1
$region0: #{tpu_custom_call.1}
  #allocation0 [shape = 'u32[]', space=smem, size = 0x4, offset = 0x4, fixed_abs, tag = 'smem constant byte address 0x4 - core index']
  #allocation1 [shape = 'u32[144,128]{1,0:T(1,128)}', space=vmem, size = 0x12000, scoped, tag = 'internal scratch']
  %s0 = inlined_call_operand.hbm [shape: f32[2,4,256], index: 0, kind: input, shape index: {}]
  %s1 = inlined_call_operand.hbm [shape: f32[2,1,256], index: 1, kind: input, shape index: {}]
  %s2 = inlined_call_operand.hbm [shape: f32[5,256], index: 2, kind: input, shape index: {}]
  %s3 = inlined_call_operand.hbm [shape: f32[2,4,256], index: 3, kind: output, shape index: {}]
  %s4 = sld [smem:[#allocation0]]
  $region57: #{tpu_custom_call.1} parent=0
    _
  %s6 = ssub.s32 1, %s4
  %s7 = scalar_select 0, %s6, %s4
  $region1: #{tpu_custom_call.1} parent=0
    #allocation2 [shape = 'u8[8192]{0}', space=vmem, size = 0x2000, scoped, tag = 'input window, operand 0']
    #allocation3 [shape = 's32[2]{0}', space=sflag, size = 0x8, scoped, tag = 'scoped memory for tpu_custom_call.1']
    #allocation4 [shape = 's32[2]{0}', space=sflag, size = 0x8, scoped, tag = 'scoped memory for tpu_custom_call.1']
    #allocation5 [shape = 'u8[2048]{0}', space=vmem, size = 0x800, scoped, tag = 'input window, operand 1']
    #allocation6 [shape = 's32[2]{0}', space=sflag, size = 0x8, scoped, tag = 'scoped memory for tpu_custom_call.1']
    #allocation7 [shape = 'u8[8192]{0}', space=vmem, size = 0x2000, scoped, tag = 'input window, operand 2, single buffered']
    #allocation8 [shape = 'u8[8192]{0}', space=vmem, size = 0x2000, scoped, tag = 'output window, operand 0']
    %8 = vsyncpa [#allocation3], 0
    %s9 = scalar_lea.sflag [#allocation3], 1
    %10 = vsyncpa %s9, 0
    %11 = vsyncpa [#allocation6], 0
    %s12 = scalar_lea.sflag [#allocation6], 1
    %13 = vsyncpa %s12, 0
    %14 = vsyncpa [#allocation4], 0
    %s15 = scalar_lea.sflag [#allocation4], 1
    %16 = vsyncpa %s15, 0
    loop: start=0, step=1, limit=4
    $region2: #{tpu_custom_call.1} parent=1 // loop_pre_header
      _
    $region3: #{tpu_custom_call.1} parent=1 // loop_header
      %s18 = sphi 0, %s22
      %p19 = scmp.ge.s32.totalorder %s18, 4
      %s25 = sphi 0, %s37
      %s26 = sphi 0, %s33
      %s27 = sphi 0, %s25
      %s28 = sphi 0, %s26
      %s29 = sphi 0, %s27
      %s30 = sphi 0, %s28
      %s42 = sphi 0, %s44
      %s45 = sphi 0, %s42
      %s46 = sphi 0, %s45
      %s62 = sphi 0, %s46
      %s68 = sphi 0, %s70
      %s71 = sphi 0, %s68
      %s72 = sphi 0, %s71
      %s88 = sphi 0, %s72
      %s92 = sphi 0, %s92
      %s94 = sphi 0, %s92
      %s95 = sphi 0, %s94
      %s109 = sphi 0, %s95
      %s117 = sphi 0, %s119
      %s120 = sphi 0, %s117
      %s121 = sphi 0, %s120
      %s137 = sphi 0, %s121
    $region4: #{tpu_custom_call.1} parent=1 // loop_header_branch
      %21 = sbr.rel (%p19) target = $region8
    $region5: #{tpu_custom_call.1} parent=1 // loop_body
      %s23 = ssub.s32 %s18, 1
      %s24 = ssub.s32 %s18, 2
      %s31 = sadd.s32 1, %s26
      %p32 = scmp.ge.s32.totalorder %s31, 1
      %s33 = scalar_select %p32, 0, %s31
      %s34 = sadd.s32 1, %s25
      %s35 = scalar_select %p32, %s34, %s25
      %p36 = scmp.ge.s32.totalorder %s35, 2
      %s37 = scalar_select %p36, 0, %s35
      %s38 = ssub.s32 %s25, %s37
      %s39 = ssub.s32 %s26, %s33
      %s40 = sor.u32 %s38, %s39
      %p41 = scmp.eq.s32.totalorder %s40, 0
      %s43 = sadd.s32 %s42, 1
      %s44 = scalar_select %p41, %s42, %s43
      %p47 = pneg %p41
      %p48 = scmp.eq.s32.totalorder %s18, 1
      %p49 = por %p47, %p48
      %p50 = scmp.ne.s32.totalorder %s42, %s45
      %p51 = scmp.eq.s32.totalorder %s18, 0
      %p52 = por %p50, %p51
      %p53 = scmp.ne.s32.totalorder %s42, %s45
      %p54 = scmp.eq.s32.totalorder %s23, 1
      %p55 = por %p53, %p54
      %p56 = scmp.ne.s32.totalorder %s45, %s46
      %p57 = scmp.eq.s32.totalorder %s23, 0
      %p58 = por %p56, %p57
      %p59 = scmp.ne.s32.totalorder %s45, %s46
      %p60 = scmp.eq.s32.totalorder %s24, 1
      %p61 = por %p59, %p60
      %p63 = scmp.ne.s32.totalorder %s46, %s62
      %p64 = scmp.eq.s32.totalorder %s24, 0
      %p65 = por %p63, %p64
      %s66 = ssub.s32 %s25, %s37
      %p67 = scmp.eq.s32.totalorder %s66, 0
      %s69 = sadd.s32 %s68, 1
      %s70 = scalar_select %p67, %s68, %s69
      %p73 = pneg %p67
      %p74 = scmp.eq.s32.totalorder %s18, 1
      %p75 = por %p73, %p74
      %p76 = scmp.ne.s32.totalorder %s68, %s71
      %p77 = scmp.eq.s32.totalorder %s18, 0
      %p78 = por %p76, %p77
      %p79 = scmp.ne.s32.totalorder %s68, %s71
      %p80 = scmp.eq.s32.totalorder %s23, 1
      %p81 = por %p79, %p80
      %p82 = scmp.ne.s32.totalorder %s71, %s72
      %p83 = scmp.eq.s32.totalorder %s23, 0
      %p84 = por %p82, %p83
      %p85 = scmp.ne.s32.totalorder %s71, %s72
      %p86 = scmp.eq.s32.totalorder %s24, 1
      %p87 = por %p85, %p86
      %p89 = scmp.ne.s32.totalorder %s72, %s88
      %p90 = scmp.eq.s32.totalorder %s24, 0
      %p91 = por %p89, %p90
      %s93 = sadd.s32 %s92, 1
      %p96 = scmp.eq.s32.totalorder %s18, 1
      %p97 = scmp.ne.s32.totalorder %s92, %s94
      %p98 = scmp.eq.s32.totalorder %s18, 0
      %p99 = por %p97, %p98
      %p100 = scmp.ne.s32.totalorder %s92, %s94
      %p101 = scmp.eq.s32.totalorder %s23, 1
      %p102 = por %p100, %p101
      %p103 = scmp.ne.s32.totalorder %s94, %s95
      %p104 = scmp.eq.s32.totalorder %s23, 0
      %p105 = por %p103, %p104
      %p106 = scmp.ne.s32.totalorder %s94, %s95
      %p107 = scmp.eq.s32.totalorder %s24, 1
      %p108 = por %p106, %p107
      %p110 = scmp.ne.s32.totalorder %s95, %s109
      %p111 = scmp.eq.s32.totalorder %s24, 0
      %p112 = por %p110, %p111
      %s113 = ssub.s32 %s25, %s37
      %s114 = ssub.s32 %s26, %s33
      %s115 = sor.u32 %s113, %s114
      %p116 = scmp.eq.s32.totalorder %s115, 0
      %s118 = sadd.s32 %s117, 1
      %s119 = scalar_select %p116, %s117, %s118
      %p122 = pneg %p116
      %p123 = scmp.eq.s32.totalorder %s18, 1
      %p124 = por %p122, %p123
      %p125 = scmp.ne.s32.totalorder %s117, %s120
      %p126 = scmp.eq.s32.totalorder %s18, 0
      %p127 = por %p125, %p126
      %p128 = scmp.ne.s32.totalorder %s117, %s120
      %p129 = scmp.eq.s32.totalorder %s23, 1
      %p130 = por %p128, %p129
      %p131 = scmp.ne.s32.totalorder %s120, %s121
      %p132 = scmp.eq.s32.totalorder %s23, 0
      %p133 = por %p131, %p132
      %p134 = scmp.ne.s32.totalorder %s120, %s121
      %p135 = scmp.eq.s32.totalorder %s24, 1
      %p136 = por %p134, %p135
      %p138 = scmp.ne.s32.totalorder %s121, %s137
      %p139 = scmp.eq.s32.totalorder %s24, 0
      %p140 = por %p138, %p139
      %p141 = scmp.le.s32.totalorder 1, %s18
      %p142 = scmp.lt.s32.totalorder %s18, 3
      %p143 = pnand %p141, %p142
      %p144 = pneg %p143
      // Predicated region
      $region9: #{tpu_custom_call.1} parent=5 // pred_check
        _
      $region10: #{tpu_custom_call.1} parent=5 // pred_check_branch
        %146 = sbr.rel (%p143) target = $region12
      $region11: #{tpu_custom_call.1} parent=5 // pred_region
        %s147 = ssub.s32 %s18, 1
        // Predicated region
        $region13: #{tpu_custom_call.1} parent=11 // pred_check
          %p148 = pneg %p105
        $region14: #{tpu_custom_call.1} parent=11 // pred_check_branch
          %150 = sbr.rel (%p148) target = $region16
        $region15: #{tpu_custom_call.1} parent=11 // pred_region
          %s152 = ssub.s32 256, 256
          %153 = vsyncadd [#allocation6], %s152
          %s155 = sshll.u32 [#allocation7], 4
          %s156 = int_to_ptr.vmem [resolvable:$true] %s155
          %158 = dma.hbm_to_vmem [thread:$0]  %s2, 256, %s156, [#allocation6]
        $region16: #{tpu_custom_call.1} parent=11 // pred_fallthru
          _
      $region12: #{tpu_custom_call.1} parent=5 // pred_fallthru
        _
      %p159 = scmp.lt.s32.totalorder %s18, 2
      // Predicated region
      $region17: #{tpu_custom_call.1} parent=5 // pred_check
        %p160 = pneg %p159
      $region18: #{tpu_custom_call.1} parent=5 // pred_check_branch
        %162 = sbr.rel (%p160) target = $region20
      $region19: #{tpu_custom_call.1} parent=5 // pred_region
        // Predicated region
        $region21: #{tpu_custom_call.1} parent=19 // pred_check
          %p163 = pneg %p52
        $region22: #{tpu_custom_call.1} parent=19 // pred_check_branch
          %165 = sbr.rel (%p163) target = $region24
        $region23: #{tpu_custom_call.1} parent=19 // pred_region
          %s166 = sand.u32 %s42, 1
          %s167 = scalar_lea.sflag [#allocation3], %s166
          %s168 = sand.u32 %s42, 1
          %s169 = smul.addr %s168, 8
          %s170 = scalar_lea.vmem [#allocation2], %s169
          %s172 = ssub.s32 128, 128
          %173 = vsyncadd %s167, %s172
          %s174 = smul.addr %s26, 2
          %s175 = smul.addr %s25, 2
          %s176 = sadd.s32 %s174, %s175
          %s177 = smul.addr %s176, 64
          %s178 = scalar_lea.hbm %s0, %s177
          %s180 = sshll.u32 %s170, 4
          %s181 = int_to_ptr.vmem [resolvable:$true] %s180
          %183 = dma.hbm_to_vmem [thread:$0]  %s178, 128, %s181, %s167
        $region24: #{tpu_custom_call.1} parent=19 // pred_fallthru
          _
        // Predicated region
        $region25: #{tpu_custom_call.1} parent=19 // pred_check
          %p184 = pneg %p78
        $region26: #{tpu_custom_call.1} parent=19 // pred_check_branch
          %186 = sbr.rel (%p184) target = $region28
        $region27: #{tpu_custom_call.1} parent=19 // pred_region
          %s187 = sand.u32 %s18, 1
          %s188 = scalar_lea.sflag [#allocation6], %s187
          %s189 = sand.u32 %s68, 1
          %s190 = smul.addr %s189, 2
          %s191 = scalar_lea.vmem [#allocation5], %s190
          %s193 = ssub.s32 32, 32
          %194 = vsyncadd %s188, %s193
          %s195 = smul.addr %s25, 2
          %s196 = smul.addr %s195, 16
          %s197 = scalar_lea.hbm %s1, %s196
          %s199 = sshll.u32 %s191, 4
          %s200 = int_to_ptr.vmem [resolvable:$true] %s199
          %202 = dma.hbm_to_vmem [thread:$0]  %s197, 32, %s200, %s188
        $region28: #{tpu_custom_call.1} parent=19 // pred_fallthru
          _
      $region20: #{tpu_custom_call.1} parent=5 // pred_fallthru
        _
      %p203 = scmp.le.s32.totalorder 1, %s18
      %p204 = scmp.lt.s32.totalorder %s18, 3
      %p205 = pnand %p203, %p204
      %p206 = pneg %p205
      // Predicated region
      $region29: #{tpu_custom_call.1} parent=5 // pred_check
        _
      $region30: #{tpu_custom_call.1} parent=5 // pred_check_branch
        %208 = sbr.rel (%p205) target = $region32
      $region31: #{tpu_custom_call.1} parent=5 // pred_region
        %s209 = ssub.s32 %s18, 1
        %s210 = sand.u32 %s45, 1
        %s211 = scalar_lea.sflag [#allocation3], %s210
        %s212 = sand.u32 %s45, 1
        %s213 = smul.addr %s212, 8
        %s214 = scalar_lea.vmem [#allocation2], %s213
        // Predicated region
        $region33: #{tpu_custom_call.1} parent=31 // pred_check
          %p215 = pneg %p58
        $region34: #{tpu_custom_call.1} parent=31 // pred_check_branch
          %217 = sbr.rel (%p215) target = $region36
        $region35: #{tpu_custom_call.1} parent=31 // pred_region
          %218 = dma.done %s211, 128
        $region36: #{tpu_custom_call.1} parent=31 // pred_fallthru
          _
        %s219 = sand.u32 %s23, 1
        %s220 = scalar_lea.sflag [#allocation6], %s219
        %s221 = sand.u32 %s71, 1
        %s222 = smul.addr %s221, 2
        %s223 = scalar_lea.vmem [#allocation5], %s222
        // Predicated region
        $region37: #{tpu_custom_call.1} parent=31 // pred_check
          %p224 = pneg %p84
        $region38: #{tpu_custom_call.1} parent=31 // pred_check_branch
          %226 = sbr.rel (%p224) target = $region40
        $region39: #{tpu_custom_call.1} parent=31 // pred_region
          %227 = dma.done %s220, 32
        $region40: #{tpu_custom_call.1} parent=31 // pred_fallthru
          _
        // Predicated region
        $region41: #{tpu_custom_call.1} parent=31 // pred_check
          %p228 = pneg %p105
        $region42: #{tpu_custom_call.1} parent=31 // pred_check_branch
          %230 = sbr.rel (%p228) target = $region44
        $region43: #{tpu_custom_call.1} parent=31 // pred_region
          %231 = dma.done [#allocation6], 256
        $region44: #{tpu_custom_call.1} parent=31 // pred_fallthru
          _
        %s232 = sand.u32 %s45, 1
        %s233 = scalar_lea.sflag [#allocation3], %s232
        %s234 = sand.u32 %s45, 1
        %s235 = smul.addr %s234, 8
        %s236 = scalar_lea.vmem [#allocation2], %s235
        %p237 = pneg %p58
        %p238 = pneg %p55
        %s239 = sand.u32 %s23, 1
        %s240 = scalar_lea.sflag [#allocation6], %s239
        %s241 = sand.u32 %s71, 1
        %s242 = smul.addr %s241, 2
        %s243 = scalar_lea.vmem [#allocation5], %s242
        %p244 = pneg %p84
        %p245 = pneg %p81
        %p246 = pneg %p105
        %p247 = pneg %p102
        %p248 = pneg %p133
        %p249 = pneg %p130
        %s250 = sand.u32 %s120, 1
        %s251 = scalar_lea.sflag [#allocation4], %s250
        %s252 = sand.u32 %s120, 1
        %s253 = smul.addr %s252, 8
        %s254 = scalar_lea.vmem [#allocation8], %s253
        %v255 = vld [vmem:[%s214] sm:$0xff]
        %v256 = vld [vmem:[%s223] sm:$0x3]
        %v258 = vlaneseq
        %v259 = vshrl.u32 %v258, 7
        %v260 = vsub.s32 0, %v259
        %v261 = vrot.slane %v256, %v260
        %v262 = vlaneseq
        %v263 = vshrl.u32 %v262, 7
        %v264 = vsub.s32 1, %v263
        %v265 = vrot.slane %v256, %v264
        %v266 = vcombine.low %v261, %v265
        %v268 = vmul.f32 %v255, %v266
        %v269 = vld [vmem:[#allocation7] ss:$8 sm:$0x3]
        %s270 = scalar_lea.vmem [#allocation7], 1
        %v271 = vld [vmem:[%s270] ss:$8 sm:$0x3]
        %s272 = scalar_lea.vmem [#allocation7], 2
        %v273 = vld [vmem:[%s272] ss:$8 sm:$0x3]
        %v275 = vcombine.high %v268, %v268
        %276 = vrot.lane.b32.xlu0 %v275, 1
        %v277 = vpop.permute.xlu0 %276
        %279 = vrot.lane.b32.xlu0 %v268, 1
        %v280 = vpop.permute.xlu0 %279
        %vm281 = vcmask 7168
        %v282 = vsel %vm281, %v280, %v277
        %v285 = vsel %vm281, %v277, %v280
        %v287 = vlaneseq
        %v288 = vshrl.u32 %v287, 7
        %v289 = vsub.s32 0, %v288
        %v290 = vrot.slane %v271, %v289
        %v291 = vlaneseq
        %v292 = vshrl.u32 %v291, 7
        %v293 = vsub.s32 1, %v292
        %v294 = vrot.slane %v271, %v293
        %v297 = vmul.f32 %v285, %v290
        %v298 = vmul.f32 %v282, %v294
        %v301 = vcombine.low %v297, %v298
        %v303 = vadd.f32 %v268, %v301
        %304 = vrot.lane.b32.xlu0 %v268, 127
        %v305 = vpop.permute.xlu0 %304
        %306 = vrot.lane.b32.xlu0 %v275, 127
        %v307 = vpop.permute.xlu0 %306
        %vm308 = vcmask 1039360
        %v309 = vsel %vm308, %v305, %v307
        %v313 = vsel %vm308, %v307, %v305
        %v315 = vlaneseq
        %v316 = vshrl.u32 %v315, 7
        %v317 = vsub.s32 0, %v316
        %v318 = vrot.slane %v273, %v317
        %v319 = vlaneseq
        %v320 = vshrl.u32 %v319, 7
        %v321 = vsub.s32 1, %v320
        %v322 = vrot.slane %v273, %v321
        %v325 = vmul.f32 %v309, %v318
        %v326 = vmul.f32 %v313, %v322
        %v329 = vcombine.low %v325, %v326
        %v331 = vadd.f32 %v303, %v329
        %s332 = scalar_lea.vmem [#allocation7], 3
        %v333 = vld [vmem:[%s332] ss:$8 sm:$0x3]
        %s334 = scalar_lea.vmem [#allocation7], 4
        %v335 = vld [vmem:[%s334] ss:$8 sm:$0x3]
        %v337 = vcombine.high %v331, %v331
        %338 = vrot.lane.b32.xlu0 %v337, 16
        %v339 = vpop.permute.xlu0 %338
        %341 = vrot.lane.b32.xlu0 %v331, 16
        %v342 = vpop.permute.xlu0 %341
        %vm343 = vcmask 130048
        %v344 = vsel %vm343, %v342, %v339
        %v347 = vsel %vm343, %v339, %v342
        %v349 = vlaneseq
        %v350 = vshrl.u32 %v349, 7
        %v351 = vsub.s32 0, %v350
        %v352 = vrot.slane %v333, %v351
        %v353 = vlaneseq
        %v354 = vshrl.u32 %v353, 7
        %v355 = vsub.s32 1, %v354
        %v356 = vrot.slane %v333, %v355
        %v359 = vmul.f32 %v347, %v352
        %v360 = vmul.f32 %v344, %v356
        %v363 = vcombine.low %v359, %v360
        %v365 = vadd.f32 %v331, %v363
        %366 = vrot.lane.b32.xlu0 %v331, 112
        %v367 = vpop.permute.xlu0 %366
        %368 = vrot.lane.b32.xlu0 %v337, 112
        %v369 = vpop.permute.xlu0 %368
        %vm370 = vcmask 916480
        %v371 = vsel %vm370, %v367, %v369
        %v375 = vsel %vm370, %v369, %v367
        %v377 = vlaneseq
        %v378 = vshrl.u32 %v377, 7
        %v379 = vsub.s32 0, %v378
        %v380 = vrot.slane %v335, %v379
        %v381 = vlaneseq
        %v382 = vshrl.u32 %v381, 7
        %v383 = vsub.s32 1, %v382
        %v384 = vrot.slane %v335, %v383
        %v387 = vmul.f32 %v371, %v380
        %v388 = vmul.f32 %v375, %v384
        %v391 = vcombine.low %v387, %v388
        %v393 = vadd.f32 %v365, %v391
        %v395 = vlaneseq
        %v396 = vshrl.u32 %v395, 7
        %v397 = vsub.s32 0, %v396
        %v398 = vrot.slane %v269, %v397
        %v399 = vlaneseq
        %v400 = vshrl.u32 %v399, 7
        %v401 = vsub.s32 1, %v400
        %v402 = vrot.slane %v269, %v401
        %v403 = vcombine.low %v398, %v402
        %v405 = vmul.f32 %v393, %v403
        %v406 = vsub.f32 %v405, %v268
        %407 = vst [vmem:[%s254] sm:$0xff] %v406
        %s408 = sand.u32 %s120, 1
        %s409 = scalar_lea.sflag [#allocation4], %s408
        %s410 = sand.u32 %s120, 1
        %s411 = smul.addr %s410, 8
        %s412 = scalar_lea.vmem [#allocation8], %s411
        // Predicated region
        $region45: #{tpu_custom_call.1} parent=31 // pred_check
          %p413 = pneg %p130
        $region46: #{tpu_custom_call.1} parent=31 // pred_check_branch
          %415 = sbr.rel (%p413) target = $region48
        $region47: #{tpu_custom_call.1} parent=31 // pred_region
          %s417 = ssub.s32 128, 128
          %418 = vsyncadd %s409, %s417
          %s419 = smul.addr %s28, 2
          %s420 = smul.addr %s27, 2
          %s421 = sadd.s32 %s419, %s420
          %s422 = smul.addr %s421, 64
          %s423 = scalar_lea.hbm %s3, %s422
          %s425 = sshll.u32 %s412, 4
          %s426 = int_to_ptr.vmem [resolvable:$true] %s425
          %428 = dma.vmem_to_hbm [thread:$0]  %s426, 128, %s423, %s409
        $region48: #{tpu_custom_call.1} parent=31 // pred_fallthru
          _
      $region32: #{tpu_custom_call.1} parent=5 // pred_fallthru
        _
      %p429 = scmp.le.s32.totalorder 2, %s18
      // Predicated region
      $region49: #{tpu_custom_call.1} parent=5 // pred_check
        %p430 = pneg %p429
      $region50: #{tpu_custom_call.1} parent=5 // pred_check_branch
        %432 = sbr.rel (%p430) target = $region52
      $region51: #{tpu_custom_call.1} parent=5 // pred_region
        %s433 = ssub.s32 %s18, 2
        // Predicated region
        $region53: #{tpu_custom_call.1} parent=51 // pred_check
          %p434 = pneg %p136
        $region54: #{tpu_custom_call.1} parent=51 // pred_check_branch
          %436 = sbr.rel (%p434) target = $region56
        $region55: #{tpu_custom_call.1} parent=51 // pred_region
          %s437 = sand.u32 %s121, 1
          %s438 = scalar_lea.sflag [#allocation4], %s437
          %s439 = sand.u32 %s121, 1
          %s440 = smul.addr %s439, 8
          %s441 = scalar_lea.vmem [#allocation8], %s440
          %442 = dma.done %s438, 128
        $region56: #{tpu_custom_call.1} parent=51 // pred_fallthru
          _
      $region52: #{tpu_custom_call.1} parent=5 // pred_fallthru
        _
    $region6: #{tpu_custom_call.1} parent=1 // loop_footer
      %s22 = sadd.s32 1, %s18
    $region7: #{tpu_custom_call.1} parent=1 // loop_footer_branch
      %17 = sbr.rel target = $region3
    $region8: #{tpu_custom_call.1} parent=1 // loop_exit
      _
    %443 = vsyncpa [#allocation3], 1
    %s444 = scalar_lea.sflag [#allocation3], 1
    %445 = vsyncpa %s444, 1
    %446 = vsyncpa [#allocation6], 1
    %s447 = scalar_lea.sflag [#allocation6], 1
    %448 = vsyncpa %s447, 1
    %449 = vsyncpa [#allocation4], 1
    %s450 = scalar_lea.sflag [#allocation4], 1
    %451 = vsyncpa %s450, 1

</llo_original>
